<compile_context>
chip_gen: v7x
topology: tpu7x:2x2x1
jax: 0.10.0
libtpu: 0.0.40
codegen_flags: <defaults>
</compile_context>

<pallas_src>
import jax
import jax.numpy as jnp
from jax.experimental import pallas as pl
from jax.experimental.pallas import tpu as pltpu


def _center_kernel(m_ref, x_ref, o_ref):
    # m_ref: VMEM (rows, 1)     -- per-row (i.e. per (batch, channel)) means
    # x_ref: VMEM (rows, cols)  -- lane-dense tile of the flattened input
    # o_ref: VMEM (rows, cols)
    o_ref[...] = x_ref[...] - m_ref[...]


def _pick_block(dim: int, align: int, cap: int) -> int:
    """Pick a block extent: full dim if it fits under the cap (always legal),
    otherwise the largest multiple of `align` <= cap (legal for (8,128) tiling)."""
    if dim <= cap:
        return dim
    return max(align, (cap // align) * align)


def input_center(x: jax.Array, means: jax.Array) -> jax.Array:
    """x: (B, C, H, W), means: (C,) -> (B, C, H, W) with per-channel mean subtracted."""
    B, C, H, W = x.shape
    R, L = B * C, H * W

    # Free, contiguous reshape to a lane-dense 2-D view.
    x2 = x.reshape(R, L)
    # Per-row means column: row r corresponds to channel r % C.
    m2 = jnp.tile(means.astype(x.dtype), B).reshape(R, 1)

    # ~2 MiB f32 blocks max: 512 rows x 1024 lanes. Double-buffered in+out
    # stays within v5e's 16 MiB scoped VMEM default; fine on v6e/v7x too.
    rows = _pick_block(R, 8, 512)
    cols = _pick_block(L, 128, 1024)
    grid = (pl.cdiv(R, rows), pl.cdiv(L, cols))

    itemsize = jnp.dtype(x.dtype).itemsize
    n_elems = R * L

    out2 = pl.pallas_call(
        _center_kernel,
        out_shape=jax.ShapeDtypeStruct((R, L), x.dtype),
        grid_spec=pl.GridSpec(
            grid=grid,
            in_specs=[
                # means column: same row-block for every lane-block.
                pl.BlockSpec((rows, 1), lambda i, j: (i, 0)),
                # x: lane-dense (rows, cols) tile.
                pl.BlockSpec((rows, cols), lambda i, j: (i, j)),
            ],
            out_specs=pl.BlockSpec((rows, cols), lambda i, j: (i, j)),
        ),
        compiler_params=pltpu.CompilerParams(
            dimension_semantics=("parallel", "parallel"),
        ),
        cost_estimate=pl.CostEstimate(
            flops=n_elems,
            transcendentals=0,
            bytes_accessed=2 * n_elems * itemsize + R * itemsize,
        ),
    )(m2, x2)

    return out2.reshape(B, C, H, W)


if __name__ == "__main__":
    key = jax.random.PRNGKey(0)
    B, C, H, W = 2, 4, 16, 16

    x = jax.random.normal(key, (B, C, H, W), dtype=jnp.float32)
    # Deterministic "dataset means" (the module's __init__ takes a List[float]).
    means = jnp.array([0.4914, 0.4822, 0.4465, 0.5000][:C], dtype=jnp.float32)

    out = input_center(x, means)
    out = jax.block_until_ready(out)

    # Reference check against the exact PyTorch semantics (broadcast subtract).
    ref = x - means.reshape(1, C, 1, 1)
    assert out.shape == (B, C, H, W)
    assert jnp.allclose(out, ref, atol=1e-6), "mismatch vs reference"

    print("KERNEL_OK")
</pallas_src>

<mosaic_0001>
module attributes {stable_mosaic.version = 11 : i64} {
  func.func @_center_kernel(%arg0: i32, %arg1: i32, %arg2: memref<8x1xf32, #tpu.memory_space<vmem>>, %arg3: memref<8x256xf32, #tpu.memory_space<vmem>>, %arg4: memref<8x256xf32, #tpu.memory_space<vmem>>) attributes {dimension_semantics = [#tpu.dimension_semantics<parallel>, #tpu.dimension_semantics<parallel>], iteration_bounds = array<i64: 1, 1>, scalar_prefetch = 0 : i64, scratch_operands = 0 : i64, tpu.core_type = #tpu.core_type<tc>, window_params = [{transform_indices = @transform_0, window_bounds = array<i64: 8, 1>}, {transform_indices = @transform_1, window_bounds = array<i64: 8, 256>}, {transform_indices = @transform_2, window_bounds = array<i64: 8, 256>}]} {
    %c0 = arith.constant 0 : index
    %c0_0 = arith.constant 0 : index
    %0 = vector.load %arg3[%c0, %c0_0] : memref<8x256xf32, #tpu.memory_space<vmem>>, vector<8x256xf32>
    %c0_1 = arith.constant 0 : index
    %c0_2 = arith.constant 0 : index
    %1 = vector.load %arg2[%c0_1, %c0_2] : memref<8x1xf32, #tpu.memory_space<vmem>>, vector<8x1xf32>
    %2 = vector.broadcast %1 : vector<8x1xf32> to vector<8x256xf32>
    %3 = arith.subf %0, %2 : vector<8x256xf32>
    %c0_3 = arith.constant 0 : index
    %c0_4 = arith.constant 0 : index
    %4 = vector.load %arg4[%c0_3, %c0_4] : memref<8x256xf32, #tpu.memory_space<vmem>>, vector<8x256xf32>
    tpu.vector_store %arg4[%c0_3, %c0_4], %3 {strides = array<i32>} : memref<8x256xf32, #tpu.memory_space<vmem>>, vector<8x256xf32>,
    return
  }
  func.func @transform_0(%arg0: i32, %arg1: i32) -> (i32, i32) {
    %c0_i32 = arith.constant 0 : i32
    %c0_i32_0 = arith.constant 0 : i32
    return %arg0, %c0_i32 : i32, i32
  }
  func.func @transform_1(%arg0: i32, %arg1: i32) -> (i32, i32) {
    %c0_i32 = arith.constant 0 : i32
    return %arg0, %arg1 : i32, i32
  }
  func.func @transform_2(%arg0: i32, %arg1: i32) -> (i32, i32) {
    %c0_i32 = arith.constant 0 : i32
    return %arg0, %arg1 : i32, i32
  }
}

</mosaic_0001>

<llo_original>
// kernel: tpu_custom_call.1
$region0: #{tpu_custom_call.1}
  #allocation0 [shape = 'u32[]', space=smem, size = 0x4, offset = 0x4, fixed_abs, tag = 'smem constant byte address 0x4 - core index']
  #allocation1 [shape = 'u32[144,128]{1,0:T(1,128)}', space=vmem, size = 0x12000, scoped, tag = 'internal scratch']
  %s0 = inlined_call_operand.vmem [shape: f32[8,1], index: 0, kind: input, shape index: {}]
  %s1 = inlined_call_operand.hbm [shape: f32[8,256], index: 1, kind: input, shape index: {}]
  %s2 = inlined_call_operand.hbm [shape: f32[8,256], index: 2, kind: output, shape index: {}]
  %s3 = sld [smem:[#allocation0]]
  $region22: #{tpu_custom_call.1} parent=0
    _
  %s5 = ssub.s32 1, %s3
  %s6 = scalar_select 0, %s5, %s3
  $region1: #{tpu_custom_call.1} parent=0
    #allocation2 [shape = 'u8[8192]{0}', space=vmem, size = 0x2000, scoped, tag = 'input window, operand 1, single buffered']
    #allocation3 [shape = 's32[1]{0}', space=sflag, size = 0x4, scoped, tag = 'scoped memory for tpu_custom_call.1']
    #allocation4 [shape = 's32[1]{0}', space=sflag, size = 0x4, scoped, tag = 'scoped memory for tpu_custom_call.1']
    #allocation5 [shape = 'u8[8192]{0}', space=vmem, size = 0x2000, scoped, tag = 'output window, operand 0, single buffered']
    %7 = vsyncpa [#allocation3], 0
    %8 = vsyncpa [#allocation4], 0
    // Predicated region
    $region2: #{tpu_custom_call.1} parent=1 // pred_check
      _
    $region3: #{tpu_custom_call.1} parent=1 // pred_check_branch
      %10 = sbr.rel (0) target = $region5
    $region4: #{tpu_custom_call.1} parent=1 // pred_region
      _
    $region5: #{tpu_custom_call.1} parent=1 // pred_fallthru
      _
    // Predicated region
    $region6: #{tpu_custom_call.1} parent=1 // pred_check
      _
    $region7: #{tpu_custom_call.1} parent=1 // pred_check_branch
      %12 = sbr.rel (0) target = $region9
    $region8: #{tpu_custom_call.1} parent=1 // pred_region
      %s14 = ssub.s32 256, 256
      %15 = vsyncadd [#allocation3], %s14
      %s17 = sshll.u32 [#allocation2], 4
      %s18 = int_to_ptr.vmem [resolvable:$true] %s17
      %20 = dma.hbm_to_vmem [thread:$0]  %s1, 256, %s18, [#allocation3]
    $region9: #{tpu_custom_call.1} parent=1 // pred_fallthru
      _
    // Predicated region
    $region10: #{tpu_custom_call.1} parent=1 // pred_check
      _
    $region11: #{tpu_custom_call.1} parent=1 // pred_check_branch
      %22 = sbr.rel (0) target = $region13
    $region12: #{tpu_custom_call.1} parent=1 // pred_region
      %23 = dma.done [#allocation3], 256
    $region13: #{tpu_custom_call.1} parent=1 // pred_fallthru
      _
    %v24 = vld [vmem:[#allocation2] sm:$0xff]
    %v25 = vld [vmem:[#allocation2 + $0x8] sm:$0xff]
    %v26 = vld [vmem:[%s0] sm:$0xff]
    %28 = vset.pattern.permute.xlu0 0
    %29 = vperm.xlu0 %28, %v26
    %v30 = vpop.permute.xlu0 %29
    %v32 = vsub.f32 %v24, %v30
    %v33 = vsub.f32 %v25, %v30
    %34 = vst [vmem:[#allocation5] sm:$0xff] %v32
    %35 = vst [vmem:[#allocation5 + $0x8] sm:$0xff] %v33
    // Predicated region
    $region14: #{tpu_custom_call.1} parent=1 // pred_check
      _
    $region15: #{tpu_custom_call.1} parent=1 // pred_check_branch
      %37 = sbr.rel (0) target = $region17
    $region16: #{tpu_custom_call.1} parent=1 // pred_region
      %s39 = ssub.s32 256, 256
      %40 = vsyncadd [#allocation4], %s39
      %s42 = sshll.u32 [#allocation5], 4
      %s43 = int_to_ptr.vmem [resolvable:$true] %s42
      %45 = dma.vmem_to_hbm [thread:$0]  %s43, 256, %s2, [#allocation4]
    $region17: #{tpu_custom_call.1} parent=1 // pred_fallthru
      _
    // Predicated region
    $region18: #{tpu_custom_call.1} parent=1 // pred_check
      _
    $region19: #{tpu_custom_call.1} parent=1 // pred_check_branch
      %47 = sbr.rel (0) target = $region21
    $region20: #{tpu_custom_call.1} parent=1 // pred_region
      %48 = dma.done [#allocation4], 256
    $region21: #{tpu_custom_call.1} parent=1 // pred_fallthru
      _
    %49 = vsyncpa [#allocation3], 1
    %50 = vsyncpa [#allocation4], 1

</llo_original>
